<compile_context>
chip_gen: v7x
topology: tpu7x:2x2x1
jax: 0.10.0
libtpu: 0.0.40
codegen_flags: <defaults>
</compile_context>

<pallas_src>
import functools
import math

import jax
import jax.numpy as jnp
from jax.experimental import pallas as pl
from jax.experimental.pallas import tpu as pltpu


# --------------------------- stage 1: fused phi|g projection ---------------------------

def _proj_kernel(x_ref, wpg_ref, bpg_ref, pg_ref):
    xb = x_ref[0].astype(jnp.bfloat16)                                    # (C, T)
    pg = jnp.dot(wpg_ref[...], xb,
                 preferred_element_type=jnp.float32) + bpg_ref[...]       # (2*Cip, T)
    pg_ref[0] = pg.astype(jnp.bfloat16)


# --------------------------- stage 2: flash attention + W + residual -------------------

def _flash_kernel(xq_ref, pg_ref, wt_ref, bt_ref, ww_ref, bw_ref, o_ref,
                  thq_sc, m_sc, l_sc, acc_sc, *, n_valid):
    ki = pl.program_id(2)
    cip = thq_sc.shape[0]
    tk = pg_ref.shape[2]

    # per q-tile init: theta projection of the already-resident query tile, stored
    # channel-major (Cip, TQ) -> no transpose; reset the online-softmax state.
    @pl.when(ki == 0)
    def _init():
        xq = xq_ref[0].astype(jnp.bfloat16)                               # (C, TQ)
        thq = jnp.dot(wt_ref[...], xq,
                      preferred_element_type=jnp.float32) + bt_ref[...]   # (Cip, TQ)
        thq_sc[...] = thq.astype(jnp.bfloat16)
        m_sc[...] = jnp.full_like(m_sc, -jnp.inf)
        l_sc[...] = jnp.zeros_like(l_sc)
        acc_sc[...] = jnp.zeros_like(acc_sc)

    pg = pg_ref[0]                                                        # (2*Cip, TK) bf16
    ph = pg[:cip, :]                                                      # (Cip, TK)
    g = pg[cip:, :]                                                       # (Cip, TK)

    # scores in (TK, TQ): softmax reduces over sublanes, state stays lane-dense.
    s = jax.lax.dot_general(ph, thq_sc[...], (((0,), (0,)), ((), ())),
                            preferred_element_type=jnp.float32)           # (TK, TQ)
    if n_valid is not None:   # static: spatial padding present -> mask padded keys
        kidx = ki * tk + jax.lax.broadcasted_iota(jnp.int32, s.shape, 0)
        s = jnp.where(kidx < n_valid, s, jnp.float32(-1e30))

    m_prev = m_sc[...]                                                    # (1, TQ)
    m_new = jnp.maximum(m_prev, jnp.max(s, axis=0, keepdims=True))
    alpha = jnp.exp(m_prev - m_new)
    p = jnp.exp(s - m_new)                                                # (TK, TQ)
    l_sc[...] = alpha * l_sc[...] + jnp.sum(p, axis=0, keepdims=True)
    acc_sc[...] = alpha * acc_sc[...] + jnp.dot(
        g, p.astype(jnp.bfloat16), preferred_element_type=jnp.float32)    # (Cip, TQ)
    m_sc[...] = m_new

    # finalize: normalize, output 1x1 conv (NN matmul), residual add (lane-dense store).
    @pl.when(ki == pl.num_programs(2) - 1)
    def _finalize():
        y = acc_sc[...] * pl.reciprocal(l_sc[...], approx=True)           # (Cip, TQ)
        w_y = jnp.dot(ww_ref[...], y.astype(jnp.bfloat16),
                      preferred_element_type=jnp.float32) + bw_ref[...]   # (C, TQ)
        o_ref[0] = (w_y + xq_ref[0]).astype(o_ref.dtype)


# ------------------------------------- wrapper -----------------------------------------

def _choose_tile(n):
    # Largest lane-dense tile with bounded padding waste; smaller tiles at small N
    # keep the parallel grid >= 2 slices so both v7x TensorCores have work.
    if n >= 2048:
        return 512
    if n >= 512:
        return 256
    return 128


def _vmem_limit_bytes(c, cip, tq, tk):
    f32, bf16, dbuf = 4, 2, 2
    tiles = dbuf * (c * tq * f32 + 2 * cip * tk * bf16 + c * tq * f32)
    weights = cip * c * bf16 + cip * f32 + c * cip * bf16 + c * f32
    scratch = cip * tq * (bf16 + f32) + 2 * tq * f32
    temps = 4 * tq * tk * f32                      # s / p temporaries (+ margin)
    est = 2 * (tiles + weights + scratch + temps)
    # >= 32 MiB (safe default on every gen), <= 48 MiB (headroom on v7x's 64 MiB VMEM).
    return int(min(max(est, 32 << 20), 48 << 20))


def nonlocal_block_pallas(x_nchw, params, *, tq=None, tk=None):
    """x_nchw: (B, C, H, W) float32 -> z (B, C, H, W), matching the PyTorch module."""
    B, C, H, W = x_nchw.shape
    N = H * W
    Ci = params["wg"].shape[0]
    Cip = max(8, -(-Ci // 8) * 8)          # pad inter_channels to a multiple of 8

    tq = tq or _choose_tile(N)
    tk = tk or tq
    step = math.lcm(tq, tk)
    n_pad = -(-N // step) * step

    x_flat = x_nchw.reshape(B, C, N)       # free reshape: N on lanes, no transpose
    if n_pad != N:
        x_flat = jnp.pad(x_flat, ((0, 0), (0, 0), (0, n_pad - N)))

    bf16, f32 = jnp.bfloat16, jnp.float32
    pad_w = lambda w: jnp.pad(w, ((0, Cip - Ci), (0, 0)))            # (Ci,C) -> (Cip,C)
    pad_b = lambda b: jnp.pad(b, (0, Cip - Ci)).reshape(-1, 1)       # (Ci,)  -> (Cip,1)

    wt = pad_w(params["wt"]).astype(bf16)                                # (Cip, C)
    bt = pad_b(params["bt"]).astype(f32)                                 # (Cip, 1)
    wpg = jnp.concatenate([pad_w(params["wp"]), pad_w(params["wg"])],
                          axis=0).astype(bf16)                           # (2*Cip, C)
    bpg = jnp.concatenate([pad_b(params["bp"]), pad_b(params["bg"])],
                          axis=0).astype(f32)                            # (2*Cip, 1)
    ww = jnp.pad(params["ww"], ((0, 0), (0, Cip - Ci))).astype(bf16)     # (C, Cip)
    bw = params["bw"].reshape(C, 1).astype(f32)                          # (C, 1)

    # ---- stage 1: hoisted phi|g projection -> bf16 lane-dense (B, 2*Cip, N_pad) ----
    pg = pl.pallas_call(
        _proj_kernel,
        out_shape=jax.ShapeDtypeStruct((B, 2 * Cip, n_pad), bf16),
        grid_spec=pltpu.PrefetchScalarGridSpec(
            num_scalar_prefetch=0,
            grid=(B, n_pad // tk),
            in_specs=[
                pl.BlockSpec((1, C, tk), lambda b, i: (b, 0, i)),
                pl.BlockSpec((2 * Cip, C), lambda b, i: (0, 0)),
                pl.BlockSpec((2 * Cip, 1), lambda b, i: (0, 0)),
            ],
            out_specs=pl.BlockSpec((1, 2 * Cip, tk), lambda b, i: (b, 0, i)),
        ),
        compiler_params=pltpu.CompilerParams(
            dimension_semantics=("parallel", "parallel")),
    )(x_flat, wpg, bpg)

    # ---- stage 2: flash attention + output projection + residual -------------------
    kernel = functools.partial(_flash_kernel,
                               n_valid=(N if n_pad != N else None))
    z_flat = pl.pallas_call(
        kernel,
        out_shape=jax.ShapeDtypeStruct((B, C, n_pad), x_flat.dtype),
        grid_spec=pltpu.PrefetchScalarGridSpec(
            num_scalar_prefetch=0,
            grid=(B, n_pad // tq, n_pad // tk),
            in_specs=[
                pl.BlockSpec((1, C, tq), lambda b, qi, ki: (b, 0, qi)),        # x (query / residual)
                pl.BlockSpec((1, 2 * Cip, tk), lambda b, qi, ki: (b, 0, ki)),  # phi|g key tile (bf16)
                pl.BlockSpec((Cip, C), lambda b, qi, ki: (0, 0)),              # theta weight
                pl.BlockSpec((Cip, 1), lambda b, qi, ki: (0, 0)),              # theta bias
                pl.BlockSpec((C, Cip), lambda b, qi, ki: (0, 0)),              # W weight
                pl.BlockSpec((C, 1), lambda b, qi, ki: (0, 0)),                # W bias
            ],
            out_specs=pl.BlockSpec((1, C, tq), lambda b, qi, ki: (b, 0, qi)),
            scratch_shapes=[
                pltpu.VMEM((Cip, tq), jnp.bfloat16),   # cached theta of the q-tile
                pltpu.VMEM((1, tq), jnp.float32),      # running max (lane-dense)
                pltpu.VMEM((1, tq), jnp.float32),      # running sum (lane-dense)
                pltpu.VMEM((Cip, tq), jnp.float32),    # output accumulator (lane-dense)
            ],
        ),
        compiler_params=pltpu.CompilerParams(
            dimension_semantics=("parallel", "parallel", "arbitrary"),
            vmem_limit_bytes=_vmem_limit_bytes(C, Cip, tq, tk),
        ),
    )(x_flat, pg, wt, bt, ww, bw)

    return z_flat[:, :, :N].reshape(B, C, H, W)


# -------------------------------- params / reference ------------------------------------

def init_params(key, in_channels):
    """Parameter shapes mirroring the module: g/theta/phi Conv2d(C->Ci,1x1) with bias;
    W Conv2d(Ci->C,1x1) zero-initialized (nn.init.constant_)."""
    inter = max(in_channels // 2, 1)
    ks = jax.random.split(key, 6)
    scale = 1.0 / jnp.sqrt(in_channels)
    return {
        "wg": jax.random.uniform(ks[0], (inter, in_channels), jnp.float32, -scale, scale),
        "bg": jax.random.uniform(ks[1], (inter,), jnp.float32, -scale, scale),
        "wt": jax.random.uniform(ks[2], (inter, in_channels), jnp.float32, -scale, scale),
        "bt": jax.random.uniform(ks[3], (inter,), jnp.float32, -scale, scale),
        "wp": jax.random.uniform(ks[4], (inter, in_channels), jnp.float32, -scale, scale),
        "bp": jax.random.uniform(ks[5], (inter,), jnp.float32, -scale, scale),
        "ww": jnp.zeros((in_channels, inter), jnp.float32),   # W zero-init -> z == x
        "bw": jnp.zeros((in_channels,), jnp.float32),
    }


def nonlocal_block_ref(x_nchw, params):
    """Pure-JAX f32 reference of the same math, for a numerical self-check."""
    B, C, H, W = x_nchw.shape
    x = x_nchw.reshape(B, C, H * W)
    g = jnp.einsum("ic,bcn->bin", params["wg"], x) + params["bg"][None, :, None]
    th = jnp.einsum("ic,bcn->bin", params["wt"], x) + params["bt"][None, :, None]
    ph = jnp.einsum("ic,bcn->bin", params["wp"], x) + params["bp"][None, :, None]
    f = jnp.einsum("biq,bik->bqk", th, ph)
    p = jax.nn.softmax(f, axis=-1)
    y = jnp.einsum("bqk,bik->biq", p, g)
    wy = jnp.einsum("ci,biq->bcq", params["ww"], y) + params["bw"][None, :, None]
    return (wy + x).reshape(B, C, H, W)


if __name__ == "__main__":
    key = jax.random.PRNGKey(0)
    k_x, k_p, k_w, k_x2 = jax.random.split(key, 4)

    B, C, H, W = 2, 4, 16, 16
    x = jax.random.normal(k_x, (B, C, H, W), jnp.float32)
    params = init_params(k_p, C)

    # Faithful init (W zero-initialized) -> z == x.
    z = jax.block_until_ready(nonlocal_block_pallas(x, params))
    assert z.shape == x.shape
    assert jnp.allclose(z, x, atol=1e-5, rtol=1e-5)

    # Nonzero W + explicit 128x128 tiles so the multi-key-tile online softmax runs
    # (flash grid = (2, 2, 2)); compare against the f32 reference.
    inter = params["wg"].shape[0]
    params_chk = dict(params)
    params_chk["ww"] = jax.random.normal(k_w, (C, inter), jnp.float32) * 0.1
    params_chk["bw"] = jnp.full((C,), 0.05, jnp.float32)

    z_k = jax.block_until_ready(nonlocal_block_pallas(x, params_chk, tq=128, tk=128))
    z_r = nonlocal_block_ref(x, params_chk)
    # bf16 MXU operands + approx reciprocal -> slightly looser tolerance than f32.
    assert jnp.allclose(z_k, z_r, atol=5e-2, rtol=5e-2), float(jnp.max(jnp.abs(z_k - z_r)))

    # Non-128-divisible spatial size (14x14 = 196): exercises the pad-and-mask path.
    x2 = jax.random.normal(k_x2, (1, C, 14, 14), jnp.float32)
    z2_k = jax.block_until_ready(nonlocal_block_pallas(x2, params_chk))
    z2_r = nonlocal_block_ref(x2, params_chk)
    assert jnp.allclose(z2_k, z2_r, atol=5e-2, rtol=5e-2), float(jnp.max(jnp.abs(z2_k - z2_r)))

    print("KERNEL_OK")
</pallas_src>

<mosaic_0001>
module attributes {stable_mosaic.version = 11 : i64} {
  func.func @_proj_kernel(%arg0: i32, %arg1: i32, %arg2: memref<1x4x128xf32, #tpu.memory_space<vmem>>, %arg3: memref<16x4xbf16, #tpu.memory_space<vmem>>, %arg4: memref<16x1xf32, #tpu.memory_space<vmem>>, %arg5: memref<1x16x128xbf16, #tpu.memory_space<vmem>>) attributes {dimension_semantics = [#tpu.dimension_semantics<parallel>, #tpu.dimension_semantics<parallel>], iteration_bounds = array<i64: 2, 2>, scalar_prefetch = 0 : i64, scratch_operands = 0 : i64, tpu.core_type = #tpu.core_type<tc>, window_params = [{transform_indices = @transform_0, window_bounds = array<i64: 1, 4, 128>}, {pipeline_mode = #tpu.pipeline_mode<synchronous>, transform_indices = @transform_1, window_bounds = array<i64: 16, 4>}, {pipeline_mode = #tpu.pipeline_mode<synchronous>, transform_indices = @transform_2, window_bounds = array<i64: 16, 1>}, {transform_indices = @transform_3, window_bounds = array<i64: 1, 16, 128>}]} {
    %c0 = arith.constant 0 : index
    %c0_0 = arith.constant 0 : index
    %c0_1 = arith.constant 0 : index
    %0 = vector.load %arg2[%c0, %c0_0, %c0_1] : memref<1x4x128xf32, #tpu.memory_space<vmem>>, vector<1x4x128xf32>
    %1 = vector.shape_cast %0 : vector<1x4x128xf32> to vector<4x128xf32>
    %2 = arith.truncf %1 : vector<4x128xf32> to vector<4x128xbf16>
    %c0_2 = arith.constant 0 : index
    %c0_3 = arith.constant 0 : index
    %3 = vector.load %arg3[%c0_2, %c0_3] : memref<16x4xbf16, #tpu.memory_space<vmem>>, vector<16x4xbf16>
    %cst = arith.constant dense<0.000000e+00> : vector<16x128xf32>
    %4 = tpu.matmul %3, %2, %cst {dimension_numbers = #tpu.dot_dimension_numbers<[1], [0], [0], [1], [0, 0, 1, 1], [], []>} : vector<16x4xbf16>, vector<4x128xbf16>, vector<16x128xf32> -> vector<16x128xf32>
    %c0_4 = arith.constant 0 : index
    %c0_5 = arith.constant 0 : index
    %5 = vector.load %arg4[%c0_4, %c0_5] : memref<16x1xf32, #tpu.memory_space<vmem>>, vector<16x1xf32>
    %6 = vector.broadcast %5 : vector<16x1xf32> to vector<16x128xf32>
    %7 = arith.addf %4, %6 : vector<16x128xf32>
    %8 = arith.truncf %7 : vector<16x128xf32> to vector<16x128xbf16>
    %c0_6 = arith.constant 0 : index
    %c0_7 = arith.constant 0 : index
    %c0_8 = arith.constant 0 : index
    %9 = vector.load %arg5[%c0_6, %c0_7, %c0_8] : memref<1x16x128xbf16, #tpu.memory_space<vmem>>, vector<1x16x128xbf16>
    %10 = vector.shape_cast %9 : vector<1x16x128xbf16> to vector<16x128xbf16>
    %11 = vector.shape_cast %8 : vector<16x128xbf16> to vector<1x16x128xbf16>
    tpu.vector_store %arg5[%c0_6, %c0_7, %c0_8], %11 {strides = array<i32>} : memref<1x16x128xbf16, #tpu.memory_space<vmem>>, vector<1x16x128xbf16>,
    return
  }
  func.func @transform_0(%arg0: i32, %arg1: i32) -> (i32, i32, i32) {
    %c0_i32 = arith.constant 0 : i32
    %c0_i32_0 = arith.constant 0 : i32
    return %arg0, %c0_i32, %arg1 : i32, i32, i32
  }
  func.func @transform_1(%arg0: i32, %arg1: i32) -> (i32, i32) {
    %c0_i32 = arith.constant 0 : i32
    %c0_i32_0 = arith.constant 0 : i32
    %c0_i32_1 = arith.constant 0 : i32
    return %c0_i32, %c0_i32_0 : i32, i32
  }
  func.func @transform_2(%arg0: i32, %arg1: i32) -> (i32, i32) {
    %c0_i32 = arith.constant 0 : i32
    %c0_i32_0 = arith.constant 0 : i32
    %c0_i32_1 = arith.constant 0 : i32
    return %c0_i32, %c0_i32_0 : i32, i32
  }
  func.func @transform_3(%arg0: i32, %arg1: i32) -> (i32, i32, i32) {
    %c0_i32 = arith.constant 0 : i32
    %c0_i32_0 = arith.constant 0 : i32
    return %arg0, %c0_i32, %arg1 : i32, i32, i32
  }
}

</mosaic_0001>

<llo_original>
// kernel: tpu_custom_call.1
$region0: #{tpu_custom_call.1}
  #allocation0 [shape = 'u32[]', space=smem, size = 0x4, offset = 0x4, fixed_abs, tag = 'smem constant byte address 0x4 - core index']
  #allocation1 [shape = 'u32[144,128]{1,0:T(1,128)}', space=vmem, size = 0x12000, scoped, tag = 'internal scratch']
  %s0 = inlined_call_operand.vmem [shape: f32[2,4,256], index: 0, kind: input, shape index: {}]
  %s1 = inlined_call_operand.vmem [shape: bf16[16,4], index: 1, kind: input, shape index: {}]
  %s2 = inlined_call_operand.vmem [shape: f32[16,1], index: 2, kind: input, shape index: {}]
  %s3 = inlined_call_operand.hbm [shape: bf16[2,16,256], index: 3, kind: output, shape index: {}]
  %s4 = sld [smem:[#allocation0]]
  $region45: #{tpu_custom_call.1} parent=0
    _
  %s6 = ssub.s32 1, %s4
  %s7 = scalar_select 0, %s6, %s4
  $region1: #{tpu_custom_call.1} parent=0
    #allocation2 [shape = 'u8[8192]{0}', space=vmem, size = 0x2000, scoped, tag = 'output window, operand 0']
    #allocation3 [shape = 's32[2]{0}', space=sflag, size = 0x8, scoped, tag = 'scoped memory for tpu_custom_call.1']
    %8 = vsyncpa [#allocation3], 0
    %s9 = scalar_lea.sflag [#allocation3], 1
    %10 = vsyncpa %s9, 0
    loop: start=0, step=1, limit=6
    $region2: #{tpu_custom_call.1} parent=1 // loop_pre_header
      _
    $region3: #{tpu_custom_call.1} parent=1 // loop_header
      %s12 = sphi 0, %s16
      %p13 = scmp.ge.s32.totalorder %s12, 6
      %s19 = sphi 0, %s31
      %s20 = sphi 0, %s27
      %s21 = sphi 0, %s19
      %s22 = sphi 0, %s20
      %s23 = sphi 0, %s21
      %s24 = sphi 0, %s22
      %s36 = sphi 0, %s38
      %s39 = sphi 0, %s36
      %s40 = sphi 0, %s39
      %s56 = sphi 0, %s40
      %s60 = sphi 0, %s60
      %s62 = sphi 0, %s60
      %s63 = sphi 0, %s62
      %s77 = sphi 0, %s63
      %s81 = sphi 0, %s81
      %s83 = sphi 0, %s81
      %s84 = sphi 0, %s83
      %s98 = sphi 0, %s84
      %s106 = sphi 0, %s108
      %s109 = sphi 0, %s106
      %s110 = sphi 0, %s109
      %s126 = sphi 0, %s110
    $region4: #{tpu_custom_call.1} parent=1 // loop_header_branch
      %15 = sbr.rel (%p13) target = $region8
    $region5: #{tpu_custom_call.1} parent=1 // loop_body
      %s17 = ssub.s32 %s12, 1
      %s18 = ssub.s32 %s12, 2
      %s25 = sadd.s32 1, %s20
      %p26 = scmp.ge.s32.totalorder %s25, 2
      %s27 = scalar_select %p26, 0, %s25
      %s28 = sadd.s32 1, %s19
      %s29 = scalar_select %p26, %s28, %s19
      %p30 = scmp.ge.s32.totalorder %s29, 2
      %s31 = scalar_select %p30, 0, %s29
      %s32 = ssub.s32 %s19, %s31
      %s33 = ssub.s32 %s20, %s27
      %s34 = sor.u32 %s32, %s33
      %p35 = scmp.eq.s32.totalorder %s34, 0
      %s37 = sadd.s32 %s36, 1
      %s38 = scalar_select %p35, %s36, %s37
      %p41 = pneg %p35
      %p42 = scmp.eq.s32.totalorder %s12, 3
      %p43 = por %p41, %p42
      %p44 = scmp.ne.s32.totalorder %s36, %s39
      %p45 = scmp.eq.s32.totalorder %s12, 0
      %p46 = por %p44, %p45
      %p47 = scmp.ne.s32.totalorder %s36, %s39
      %p48 = scmp.eq.s32.totalorder %s17, 3
      %p49 = por %p47, %p48
      %p50 = scmp.ne.s32.totalorder %s39, %s40
      %p51 = scmp.eq.s32.totalorder %s17, 0
      %p52 = por %p50, %p51
      %p53 = scmp.ne.s32.totalorder %s39, %s40
      %p54 = scmp.eq.s32.totalorder %s18, 3
      %p55 = por %p53, %p54
      %p57 = scmp.ne.s32.totalorder %s40, %s56
      %p58 = scmp.eq.s32.totalorder %s18, 0
      %p59 = por %p57, %p58
      %s61 = sadd.s32 %s60, 1
      %p64 = scmp.eq.s32.totalorder %s12, 3
      %p65 = scmp.ne.s32.totalorder %s60, %s62
      %p66 = scmp.eq.s32.totalorder %s12, 0
      %p67 = por %p65, %p66
      %p68 = scmp.ne.s32.totalorder %s60, %s62
      %p69 = scmp.eq.s32.totalorder %s17, 3
      %p70 = por %p68, %p69
      %p71 = scmp.ne.s32.totalorder %s62, %s63
      %p72 = scmp.eq.s32.totalorder %s17, 0
      %p73 = por %p71, %p72
      %p74 = scmp.ne.s32.totalorder %s62, %s63
      %p75 = scmp.eq.s32.totalorder %s18, 3
      %p76 = por %p74, %p75
      %p78 = scmp.ne.s32.totalorder %s63, %s77
      %p79 = scmp.eq.s32.totalorder %s18, 0
      %p80 = por %p78, %p79
      %s82 = sadd.s32 %s81, 1
      %p85 = scmp.eq.s32.totalorder %s12, 3
      %p86 = scmp.ne.s32.totalorder %s81, %s83
      %p87 = scmp.eq.s32.totalorder %s12, 0
      %p88 = por %p86, %p87
      %p89 = scmp.ne.s32.totalorder %s81, %s83
      %p90 = scmp.eq.s32.totalorder %s17, 3
      %p91 = por %p89, %p90
      %p92 = scmp.ne.s32.totalorder %s83, %s84
      %p93 = scmp.eq.s32.totalorder %s17, 0
      %p94 = por %p92, %p93
      %p95 = scmp.ne.s32.totalorder %s83, %s84
      %p96 = scmp.eq.s32.totalorder %s18, 3
      %p97 = por %p95, %p96
      %p99 = scmp.ne.s32.totalorder %s84, %s98
      %p100 = scmp.eq.s32.totalorder %s18, 0
      %p101 = por %p99, %p100
      %s102 = ssub.s32 %s19, %s31
      %s103 = ssub.s32 %s20, %s27
      %s104 = sor.u32 %s102, %s103
      %p105 = scmp.eq.s32.totalorder %s104, 0
      %s107 = sadd.s32 %s106, 1
      %s108 = scalar_select %p105, %s106, %s107
      %p111 = pneg %p105
      %p112 = scmp.eq.s32.totalorder %s12, 3
      %p113 = por %p111, %p112
      %p114 = scmp.ne.s32.totalorder %s106, %s109
      %p115 = scmp.eq.s32.totalorder %s12, 0
      %p116 = por %p114, %p115
      %p117 = scmp.ne.s32.totalorder %s106, %s109
      %p118 = scmp.eq.s32.totalorder %s17, 3
      %p119 = por %p117, %p118
      %p120 = scmp.ne.s32.totalorder %s109, %s110
      %p121 = scmp.eq.s32.totalorder %s17, 0
      %p122 = por %p120, %p121
      %p123 = scmp.ne.s32.totalorder %s109, %s110
      %p124 = scmp.eq.s32.totalorder %s18, 3
      %p125 = por %p123, %p124
      %p127 = scmp.ne.s32.totalorder %s110, %s126
      %p128 = scmp.eq.s32.totalorder %s18, 0
      %p129 = por %p127, %p128
      %p130 = scmp.le.s32.totalorder 1, %s12
      %p131 = scmp.lt.s32.totalorder %s12, 5
      %p132 = pnand %p130, %p131
      %p133 = pneg %p132
      // Predicated region
      $region9: #{tpu_custom_call.1} parent=5 // pred_check
        _
      $region10: #{tpu_custom_call.1} parent=5 // pred_check_branch
        %135 = sbr.rel (%p132) target = $region12
      $region11: #{tpu_custom_call.1} parent=5 // pred_region
        %s136 = ssub.s32 %s12, 1
        // Predicated region
        $region13: #{tpu_custom_call.1} parent=11 // pred_check
          %p137 = pneg %p73
        $region14: #{tpu_custom_call.1} parent=11 // pred_check_branch
          %139 = sbr.rel (%p137) target = $region16
        $region15: #{tpu_custom_call.1} parent=11 // pred_region
          _
        $region16: #{tpu_custom_call.1} parent=11 // pred_fallthru
          _
        // Predicated region
        $region17: #{tpu_custom_call.1} parent=11 // pred_check
          %p140 = pneg %p94
        $region18: #{tpu_custom_call.1} parent=11 // pred_check_branch
          %142 = sbr.rel (%p140) target = $region20
        $region19: #{tpu_custom_call.1} parent=11 // pred_region
          _
        $region20: #{tpu_custom_call.1} parent=11 // pred_fallthru
          _
      $region12: #{tpu_custom_call.1} parent=5 // pred_fallthru
        _
      %p143 = scmp.lt.s32.totalorder %s12, 4
      // Predicated region
      $region21: #{tpu_custom_call.1} parent=5 // pred_check
        %p144 = pneg %p143
      $region22: #{tpu_custom_call.1} parent=5 // pred_check_branch
        %146 = sbr.rel (%p144) target = $region24
      $region23: #{tpu_custom_call.1} parent=5 // pred_region
        // Predicated region
        $region25: #{tpu_custom_call.1} parent=23 // pred_check
          %p147 = pneg %p46
        $region26: #{tpu_custom_call.1} parent=23 // pred_check_branch
          %149 = sbr.rel (%p147) target = $region28
        $region27: #{tpu_custom_call.1} parent=23 // pred_region
          %p150 = scmp.lt.s32.totalorder %s19, 1
          %s151 = scalar_select %p150, %s19, 1
          %p152 = scmp.lt.s32.totalorder %s20, 1
          %s153 = scalar_select %p152, %s20, 1
          %s154 = smul.addr %s151, 2
          %s155 = sadd.s32 %s153, %s154
          %s156 = smul.addr %s155, 4
          %s157 = scalar_lea.vmem %s0, %s156
        $region28: #{tpu_custom_call.1} parent=23 // pred_fallthru
          _
      $region24: #{tpu_custom_call.1} parent=5 // pred_fallthru
        _
      %p158 = scmp.le.s32.totalorder 1, %s12
      %p159 = scmp.lt.s32.totalorder %s12, 5
      %p160 = pnand %p158, %p159
      %p161 = pneg %p160
      // Predicated region
      $region29: #{tpu_custom_call.1} parent=5 // pred_check
        _
      $region30: #{tpu_custom_call.1} parent=5 // pred_check_branch
        %163 = sbr.rel (%p160) target = $region32
      $region31: #{tpu_custom_call.1} parent=5 // pred_region
        %s164 = ssub.s32 %s12, 1
        %p165 = scmp.lt.s32.totalorder %s21, 1
        %s166 = scalar_select %p165, %s21, 1
        %p167 = scmp.lt.s32.totalorder %s22, 1
        %s168 = scalar_select %p167, %s22, 1
        %s169 = smul.addr %s166, 2
        %s170 = sadd.s32 %s168, %s169
        %s171 = smul.addr %s170, 4
        %s172 = scalar_lea.vmem %s0, %s171
        %p173 = pneg %p52
        %p174 = pneg %p49
        %p175 = pneg %p73
        %p176 = pneg %p70
        %p177 = pneg %p94
        %p178 = pneg %p91
        %p179 = pneg %p122
        %p180 = pneg %p119
        %s181 = sand.u32 %s109, 1
        %s182 = scalar_lea.sflag [#allocation3], %s181
        %s183 = sand.u32 %s109, 1
        %s184 = smul.addr %s183, 8
        %s185 = scalar_lea.vmem [#allocation2], %s184
        %p186 = scmp.lt.s32.totalorder %s21, 1
        %s187 = scalar_select %p186, %s21, 1
        %p188 = scmp.lt.s32.totalorder %s22, 1
        %s189 = scalar_select %p188, %s22, 1
        %s190 = smul.addr %s187, 2
        %s191 = sadd.s32 %s189, %s190
        %s192 = smul.addr %s191, 4
        %s193 = scalar_lea.vmem %s0, %s192
        %v195 = vld [vmem:[%s193] sm:$0xf]
        %v196 = vpack.c.bf16 %v195, %v195
        %v197 = vld [vmem:[%s1] sm:$0xf]
        %v198 = vld [vmem:[%s1 + $0x4] sm:$0xf]
        %v199 = vld [vmem:[%s2] sm:$0xff]
        %v200 = vld [vmem:[%s2 + $0x8] sm:$0xff]
        %202 = vset.pattern.permute.xlu0 0
        %203 = vperm.xlu0 %202, %v199
        %v204 = vpop.permute.xlu0 %203
        %207 = vset.pattern.permute.xlu0 0
        %208 = vperm.xlu0 %207, %v200
        %v209 = vpop.permute.xlu0 %208
        %v213 = vunpack.c.l.b16 %v197
        %v214 = vunpack.c.l.b16 %v198
        %v215 = vpack.c.b16 %v214, %v213
        %vm216 = vcmask 31744
        %v218 = vsel %vm216, %v215, 0
        %vm220 = vcmask 1041408
        %v222 = vsel %vm220, %v196, 0
        %224 = vmatprep.subr.bf16.mxu0 0
        %225 = vmatpush1.bf16.msra.mxu0 %v222
        %226 = vmatprep.subr.bf16.mxu0 0
        %227 = vmatpush1.bf16.msra.mxu0 0
        %228 = vmatprep.subr.bf16.mxu0 0
        %229 = vmatpush1.bf16.msra.mxu0 0
        %230 = vmatprep.subr.bf16.mxu0 0
        %231 = vmatpush1.bf16.msra.mxu0 0
        %232 = vmatprep.subr.bf16.mxu0 0
        %233 = vmatpush1.bf16.msra.mxu0 0
        %234 = vmatprep.subr.bf16.mxu0 0
        %235 = vmatpush1.bf16.msra.mxu0 0
        %236 = vmatprep.subr.bf16.mxu0 0
        %237 = vmatpush1.bf16.msra.mxu0 0
        %238 = vmatprep.subr.bf16.mxu0 0
        %239 = vmatpush1.bf16.msra.mxu0 0
        %240 = vmatprep.subr.bf16.mxu0 0
        %241 = vmatpush1.bf16.msra.mxu0 0
        %242 = vmatprep.subr.bf16.mxu0 0
        %243 = vmatpush1.bf16.msra.mxu0 0
        %244 = vmatprep.subr.bf16.mxu0 0
        %245 = vmatpush1.bf16.msra.mxu0 0
        %246 = vmatprep.subr.bf16.mxu0 0
        %247 = vmatpush1.bf16.msra.mxu0 0
        %248 = vmatprep.subr.bf16.mxu0 0
        %249 = vmatpush1.bf16.msra.mxu0 0
        %250 = vmatprep.subr.bf16.mxu0 0
        %251 = vmatpush1.bf16.msra.mxu0 0
        %252 = vmatprep.subr.bf16.mxu0 0
        %253 = vmatpush1.bf16.msra.mxu0 0
        %254 = vmatprep.subr.bf16.mxu0 0
        %255 = vmatpush1.bf16.msra.mxu0 0
        %256 = vmatprep.mubr.bf16.mxu0 0
        %257 = vmatmul.mubr.bf16.gmra.mrb[0].mxu0 %v218
        %v258 = vpop.f32.mrb[0].mxu0
        %v259 = vadd.f32 %v204, %v258
        %v260 = vpop.f32.mrb[0].mxu0
        %v261 = vpop.f32.mrb[0].mxu0
        %v262 = vadd.f32 %v209, %v261
        %v263 = vpop.f32.mrb[0].mxu0
        %264 = vdwg.mxu0
        %v265 = vpack.c.bf16 %v262, %v259
        %v267 = vunpack.c.l.b16 %v265
        %v268 = vunpack.c.h.b16 %v265
        %v269 = vpack.c.b16 %v267, %v267
        %v270 = vpack.c.b16 %v268, %v268
        %273 = vst [vmem:[%s185] sm:$0xf] %v269
        %274 = vst [vmem:[%s185 + $0x4] sm:$0xf] %v270
        %s275 = sand.u32 %s109, 1
        %s276 = scalar_lea.sflag [#allocation3], %s275
        %s277 = sand.u32 %s109, 1
        %s278 = smul.addr %s277, 8
        %s279 = scalar_lea.vmem [#allocation2], %s278
        // Predicated region
        $region33: #{tpu_custom_call.1} parent=31 // pred_check
          %p280 = pneg %p119
        $region34: #{tpu_custom_call.1} parent=31 // pred_check_branch
          %282 = sbr.rel (%p280) target = $region36
        $region35: #{tpu_custom_call.1} parent=31 // pred_region
          %s284 = ssub.s32 128, 128
          %285 = vsyncadd %s276, %s284
          %s286 = smul.addr %s21, 4
          %s287 = sadd.s32 %s22, %s286
          %s288 = smul.addr %s287, 64
          %s289 = scalar_lea.hbm %s3, %s288
          %s290 = sshll.u32 %s279, 4
          %s291 = int_to_ptr.vmem [resolvable:$true] %s290
          %296 = dma.vmem_to_hbm [thread:$0]  %s291, 128, %s289, %s276, 64, 128, 4
        $region36: #{tpu_custom_call.1} parent=31 // pred_fallthru
          _
      $region32: #{tpu_custom_call.1} parent=5 // pred_fallthru
        _
      %p297 = scmp.le.s32.totalorder 2, %s12
      // Predicated region
      $region37: #{tpu_custom_call.1} parent=5 // pred_check
        %p298 = pneg %p297
      $region38: #{tpu_custom_call.1} parent=5 // pred_check_branch
        %300 = sbr.rel (%p298) target = $region40
      $region39: #{tpu_custom_call.1} parent=5 // pred_region
        %s301 = ssub.s32 %s12, 2
        // Predicated region
        $region41: #{tpu_custom_call.1} parent=39 // pred_check
          %p302 = pneg %p125
        $region42: #{tpu_custom_call.1} parent=39 // pred_check_branch
          %304 = sbr.rel (%p302) target = $region44
        $region43: #{tpu_custom_call.1} parent=39 // pred_region
          %s305 = sand.u32 %s110, 1
          %s306 = scalar_lea.sflag [#allocation3], %s305
          %s307 = sand.u32 %s110, 1
          %s308 = smul.addr %s307, 8
          %s309 = scalar_lea.vmem [#allocation2], %s308
          %310 = dma.done %s306, 128
        $region44: #{tpu_custom_call.1} parent=39 // pred_fallthru
          _
      $region40: #{tpu_custom_call.1} parent=5 // pred_fallthru
        _
    $region6: #{tpu_custom_call.1} parent=1 // loop_footer
      %s16 = sadd.s32 1, %s12
    $region7: #{tpu_custom_call.1} parent=1 // loop_footer_branch
      %11 = sbr.rel target = $region3
    $region8: #{tpu_custom_call.1} parent=1 // loop_exit
      _
    %311 = vsyncpa [#allocation3], 1
    %s312 = scalar_lea.sflag [#allocation3], 1
    %313 = vsyncpa %s312, 1

</llo_original>
